<compile_context>
chip_gen: v7x
topology: tpu7x:2x2x1
jax: 0.10.0
libtpu: 0.0.40
codegen_flags: <defaults>
</compile_context>

<pallas_src>
import jax
import jax.numpy as jnp
from jax.experimental import pallas as pl
from jax.experimental.pallas import tpu as pltpu


FOLD = 128  # original rows folded into the 128-lane axis


def _cdiv(a, b):
    return -(-a // b)


def _round_up(x, m):
    return ((x + m - 1) // m) * m


def _make_kernel(tm, fold, d, inv_b, dot_dtype):
    """Kernel factory; tm/fold/d/inv_b/dot_dtype are trace-time constants."""

    def kernel(states_ref, w12_ref, g_ref, w_poly_ref, out_ref):
        s = states_ref[...]                          # (tm, fold*d) f32, VMEM

        # Fused linear + quadratic state term: VPU pre-scale, single MXU dot
        # against the resident 0/1 grouping matrix G -> dense (tm, fold).
        ws = w12_ref[0:1, :]                         # (1, fold*d) tiled w_s
        ws2 = w12_ref[1:2, :]                        # (1, fold*d) tiled w_s2
        eff = s * (ws + s * ws2)                     # exact f32 on the VPU
        sq = jnp.dot(eff.astype(dot_dtype), g_ref[...],
                     preferred_element_type=jnp.float32)   # (tm, fold)

        # Timestep polynomial generated in-kernel (no HBM ts stream).
        # global original row = (pid*tm + sublane)*fold + lane ;  t = row // b
        i = pl.program_id(0)
        r = jax.lax.broadcasted_iota(jnp.int32, (tm, fold), 0)
        l = jax.lax.broadcasted_iota(jnp.int32, (tm, fold), 1)
        row = (i * tm + r) * fold + l                # int32, exact
        # floor((row + 0.5) / b): the +0.5 keeps us strictly inside the
        # integer interval, so f32 rounding never flips the floor.
        t_idx = jnp.floor((row.astype(jnp.float32) + 0.5) * inv_b)
        ts = (t_idx + 1.0) * 0.01                    # (t+1)/100

        c_t = w_poly_ref[0]
        c_t2 = w_poly_ref[1]
        c_t3 = w_poly_ref[2]
        c_one = w_poly_ref[3]
        ts2 = ts * ts
        poly = ts * c_t + ts2 * c_t2 + ts2 * ts * c_t3 + c_one

        out_ref[...] = sq + poly                     # (tm, fold) unmasked stores

    return kernel


def value_network_forward(states, w, T, b, *, block_rows=1024, bf16_dot=False):
    """states: (T, b, in_size) f32; w: (2*in_size+4, 1) f32 -> (T, b, 1) f32.

    bf16_dot=True casts the grouping dot to bf16 (recommended on v5e where
    f32-via-MXU is the bottleneck); default f32 keeps ~1e-5 parity.
    """
    D = states.shape[-1]
    N = T * b

    # Fold 128 original rows into the lane axis; tile folded rows over a grid.
    M = _cdiv(N, FOLD)                               # folded rows needed
    # Cap tm so the grid has >=4 steps when possible (2 per v7x TensorCore,
    # and BlockSpec double-buffering has work to overlap).  Multiple of 8.
    tm = min(block_rows, _round_up(_cdiv(M, 4), 8))
    tm = max(tm, 8)
    M_pad = _round_up(M, tm)
    N_pad = M_pad * FOLD
    grid = (M_pad // tm,)

    dot_dtype = jnp.bfloat16 if bf16_dot else jnp.float32
    g_itemsize = 2 if bf16_dot else 4

    states_flat = states.reshape(N, D).astype(jnp.float32)
    states_flat = jnp.pad(states_flat, ((0, N_pad - N), (0, 0)))
    states_folded = states_flat.reshape(M_pad, FOLD * D)          # free reshape

    # Weight segments: [states | states^2 | ts | ts^2 | ts^3 | ones].
    w = w.astype(jnp.float32)
    w_s = w[:D, 0]                                   # (D,)
    w_s2 = w[D:2 * D, 0]                             # (D,)
    w_poly = w[2 * D:, 0]                            # (4,) [ts, ts^2, ts^3, 1]

    # Lane-tiled weight rows (resident) and the 0/1 grouping matrix G:
    # G[j*D + d, j] = 1, so dot(eff, G) sums the D lanes of each group.
    w12 = jnp.stack([jnp.tile(w_s, FOLD), jnp.tile(w_s2, FOLD)])  # (2, FOLD*D)
    group = jnp.repeat(jnp.arange(FOLD, dtype=jnp.int32), D)      # (FOLD*D,)
    G = (group[:, None] == jnp.arange(FOLD, dtype=jnp.int32)[None, :]
         ).astype(dot_dtype)                                      # (FOLD*D, FOLD)

    cost = pl.CostEstimate(
        flops=int(2 * N_pad * FOLD * D      # single grouping dot
                  + 2 * N_pad * D           # VPU pre-scale
                  + 8 * N_pad),             # timestep polynomial
        transcendentals=0,
        bytes_accessed=int(4 * (N_pad * D + N_pad + 2 * FOLD * D)
                           + g_itemsize * FOLD * D * FOLD),
    )

    kernel = _make_kernel(tm, FOLD, D, 1.0 / b, dot_dtype)

    out_folded = pl.pallas_call(
        kernel,
        out_shape=jax.ShapeDtypeStruct((M_pad, FOLD), jnp.float32),
        grid=grid,
        in_specs=[
            pl.BlockSpec((tm, FOLD * D), lambda i: (i, 0)),      # states tile
            pl.BlockSpec((2, FOLD * D), lambda i: (0, 0)),       # w12 (resident)
            pl.BlockSpec((FOLD * D, FOLD), lambda i: (0, 0)),    # G   (resident)
            pl.BlockSpec(memory_space=pltpu.MemorySpace.SMEM),   # w_poly (4,)
        ],
        out_specs=pl.BlockSpec((tm, FOLD), lambda i: (i, 0)),
        compiler_params=pltpu.CompilerParams(
            dimension_semantics=("parallel",),   # shard row grid across TCs (v7x)
            vmem_limit_bytes=32 * 1024 * 1024,
        ),
        cost_estimate=cost,
    )(states_folded, w12, G, w_poly)

    out = out_folded.reshape(N_pad)[:N]              # drop padded rows/lanes
    return out.reshape(T, b, 1)


def value_network_reference(states, w, T, b):
    """Pure-JAX reference mirroring the PyTorch forward exactly."""
    ones = jnp.ones((T, b, 1), dtype=jnp.float32)
    timestep = jnp.cumsum(ones, axis=0) / 100.0
    features = jnp.concatenate(
        [states, states ** 2, timestep, timestep ** 2, timestep ** 3, ones], axis=2
    )
    return jnp.matmul(features, w)


if __name__ == "__main__":
    key = jax.random.PRNGKey(0)

    # Check 1: small shapes consistent with the module.
    T, b, in_size = 8, 4, 6
    feature_size = 2 * in_size + 4
    k_s, k_w = jax.random.split(key)
    states = jax.random.normal(k_s, (T, b, in_size), dtype=jnp.float32)
    # Module __init__ sets w to zeros; use non-trivial values so the kernel is
    # actually exercised (same (feature_size, 1) shape).
    w = jax.random.normal(k_w, (feature_size, 1), dtype=jnp.float32)

    out = jax.block_until_ready(value_network_forward(states, w, T, b))
    ref = value_network_reference(states, w, T, b)
    assert out.shape == (T, b, 1)
    assert jnp.allclose(out, ref, atol=1e-5, rtol=1e-5)

    # Check 2: multi-block grid, non-multiple-of-128 row count, tiny tile
    # (exercises padding + in-kernel timestep generation across blocks).
    T2, b2 = 100, 20
    k_s2, k_w2 = jax.random.split(jax.random.PRNGKey(1))
    states2 = jax.random.normal(k_s2, (T2, b2, in_size), dtype=jnp.float32)
    w2 = jax.random.normal(k_w2, (feature_size, 1), dtype=jnp.float32)
    out2 = jax.block_until_ready(
        value_network_forward(states2, w2, T2, b2, block_rows=8)
    )
    ref2 = value_network_reference(states2, w2, T2, b2)
    assert out2.shape == (T2, b2, 1)
    assert jnp.allclose(out2, ref2, atol=1e-5, rtol=1e-5)

    # Check 3: default tiling path (>=4 grid steps), different in_size.
    T3, b3, in_size3 = 64, 50, 3
    k_s3, k_w3 = jax.random.split(jax.random.PRNGKey(2))
    states3 = jax.random.normal(k_s3, (T3, b3, in_size3), dtype=jnp.float32)
    w3 = jax.random.normal(k_w3, (2 * in_size3 + 4, 1), dtype=jnp.float32)
    out3 = jax.block_until_ready(value_network_forward(states3, w3, T3, b3))
    ref3 = value_network_reference(states3, w3, T3, b3)
    assert out3.shape == (T3, b3, 1)
    assert jnp.allclose(out3, ref3, atol=1e-5, rtol=1e-5)

    # Check 4: bf16 grouping-dot path (v5e option) compiles and is sane
    # (looser accuracy by construction, so only a coarse sanity bound).
    out_bf = jax.block_until_ready(
        value_network_forward(states, w, T, b, bf16_dot=True)
    )
    assert out_bf.shape == (T, b, 1)
    assert float(jnp.max(jnp.abs(out_bf - ref))) < 1.0

    print("KERNEL_OK")
</pallas_src>

<mosaic_0001>
module attributes {stable_mosaic.version = 11 : i64} {
  func.func @kernel(%arg0: i32, %arg1: memref<8x768xf32, #tpu.memory_space<vmem>>, %arg2: memref<2x768xf32, #tpu.memory_space<vmem>>, %arg3: memref<768x128xf32, #tpu.memory_space<vmem>>, %arg4: memref<4xf32, #tpu.memory_space<smem>>, %arg5: memref<8x128xf32, #tpu.memory_space<vmem>>) attributes {dimension_semantics = [#tpu.dimension_semantics<parallel>], iteration_bounds = array<i64: 1>, scalar_prefetch = 0 : i64, scratch_operands = 0 : i64, tpu.core_type = #tpu.core_type<tc>, window_params = [{transform_indices = @transform_0, window_bounds = array<i64: 8, 768>}, {pipeline_mode = #tpu.pipeline_mode<synchronous>, transform_indices = @transform_1, window_bounds = array<i64: 2, 768>}, {pipeline_mode = #tpu.pipeline_mode<synchronous>, transform_indices = @transform_2, window_bounds = array<i64: 768, 128>}, {transform_indices = @transform_3, window_bounds = array<i64: 4>}, {transform_indices = @transform_4, window_bounds = array<i64: 8, 128>}]} {
    %c0 = arith.constant 0 : index
    %c0_0 = arith.constant 0 : index
    %0 = vector.load %arg1[%c0, %c0_0] : memref<8x768xf32, #tpu.memory_space<vmem>>, vector<8x768xf32>
    %c0_1 = arith.constant 0 : index
    %c0_2 = arith.constant 0 : index
    %1 = vector.load %arg2[%c0_1, %c0_2] : memref<2x768xf32, #tpu.memory_space<vmem>>, vector<1x768xf32>
    %c1 = arith.constant 1 : index
    %c0_3 = arith.constant 0 : index
    %2 = vector.load %arg2[%c1, %c0_3] : memref<2x768xf32, #tpu.memory_space<vmem>>, vector<1x768xf32>
    %3 = vector.broadcast %2 : vector<1x768xf32> to vector<8x768xf32>
    %4 = arith.mulf %0, %3 : vector<8x768xf32>
    %5 = vector.broadcast %1 : vector<1x768xf32> to vector<8x768xf32>
    %6 = arith.addf %5, %4 : vector<8x768xf32>
    %7 = arith.mulf %0, %6 : vector<8x768xf32>
    %c0_4 = arith.constant 0 : index
    %c0_5 = arith.constant 0 : index
    %8 = vector.load %arg3[%c0_4, %c0_5] : memref<768x128xf32, #tpu.memory_space<vmem>>, vector<768x128xf32>
    %cst = arith.constant dense<0.000000e+00> : vector<8x128xf32>
    %9 = tpu.matmul %7, %8, %cst {dimension_numbers = #tpu.dot_dimension_numbers<[1], [0], [0], [1], [0, 0, 1, 1], [], []>} : vector<8x768xf32>, vector<768x128xf32>, vector<8x128xf32> -> vector<8x128xf32>
    %10 = tpu.iota {dimensions = array<i32: 0>} : vector<8x128xi32>
    %11 = tpu.iota {dimensions = array<i32: 1>} : vector<8x128xi32>
    %c8_i32 = arith.constant 8 : i32
    %12 = arith.muli %arg0, %c8_i32 : i32
    %13 = vector.broadcast %12 : i32 to vector<8x128xi32>
    %14 = arith.addi %13, %10 : vector<8x128xi32>
    %c128_i32 = arith.constant 128 : i32
    %15 = vector.broadcast %c128_i32 : i32 to vector<8x128xi32>
    %16 = arith.muli %14, %15 : vector<8x128xi32>
    %17 = arith.addi %16, %11 : vector<8x128xi32>
    %18 = arith.sitofp %17 : vector<8x128xi32> to vector<8x128xf32>
    %cst_6 = arith.constant 5.000000e-01 : f32
    %19 = vector.broadcast %cst_6 : f32 to vector<8x128xf32>
    %20 = arith.addf %18, %19 : vector<8x128xf32>
    %cst_7 = arith.constant 2.500000e-01 : f32
    %21 = vector.broadcast %cst_7 : f32 to vector<8x128xf32>
    %22 = arith.mulf %20, %21 : vector<8x128xf32>
    %23 = math.floor %22 : vector<8x128xf32>
    %cst_8 = arith.constant 1.000000e+00 : f32
    %24 = vector.broadcast %cst_8 : f32 to vector<8x128xf32>
    %25 = arith.addf %23, %24 : vector<8x128xf32>
    %cst_9 = arith.constant 0.00999999977 : f32
    %26 = vector.broadcast %cst_9 : f32 to vector<8x128xf32>
    %27 = arith.mulf %25, %26 : vector<8x128xf32>
    %c0_10 = arith.constant 0 : index
    %28 = memref.load %arg4[%c0_10] : memref<4xf32, #tpu.memory_space<smem>>
    %c1_11 = arith.constant 1 : index
    %29 = memref.load %arg4[%c1_11] : memref<4xf32, #tpu.memory_space<smem>>
    %c2 = arith.constant 2 : index
    %30 = memref.load %arg4[%c2] : memref<4xf32, #tpu.memory_space<smem>>
    %c3 = arith.constant 3 : index
    %31 = memref.load %arg4[%c3] : memref<4xf32, #tpu.memory_space<smem>>
    %32 = arith.mulf %27, %27 : vector<8x128xf32>
    %33 = vector.broadcast %28 : f32 to vector<8x128xf32>
    %34 = arith.mulf %27, %33 : vector<8x128xf32>
    %35 = vector.broadcast %29 : f32 to vector<8x128xf32>
    %36 = arith.mulf %32, %35 : vector<8x128xf32>
    %37 = arith.addf %34, %36 : vector<8x128xf32>
    %38 = arith.mulf %32, %27 : vector<8x128xf32>
    %39 = vector.broadcast %30 : f32 to vector<8x128xf32>
    %40 = arith.mulf %38, %39 : vector<8x128xf32>
    %41 = arith.addf %37, %40 : vector<8x128xf32>
    %42 = vector.broadcast %31 : f32 to vector<8x128xf32>
    %43 = arith.addf %41, %42 : vector<8x128xf32>
    %44 = arith.addf %9, %43 : vector<8x128xf32>
    %c0_12 = arith.constant 0 : index
    %c0_13 = arith.constant 0 : index
    %45 = vector.load %arg5[%c0_12, %c0_13] : memref<8x128xf32, #tpu.memory_space<vmem>>, vector<8x128xf32>
    tpu.vector_store %arg5[%c0_12, %c0_13], %44 {strides = array<i32>} : memref<8x128xf32, #tpu.memory_space<vmem>>, vector<8x128xf32>,
    return
  }
  func.func @transform_0(%arg0: i32) -> (i32, i32) {
    %c0_i32 = arith.constant 0 : i32
    %c0_i32_0 = arith.constant 0 : i32
    return %arg0, %c0_i32 : i32, i32
  }
  func.func @transform_1(%arg0: i32) -> (i32, i32) {
    %c0_i32 = arith.constant 0 : i32
    %c0_i32_0 = arith.constant 0 : i32
    %c0_i32_1 = arith.constant 0 : i32
    return %c0_i32, %c0_i32_0 : i32, i32
  }
  func.func @transform_2(%arg0: i32) -> (i32, i32) {
    %c0_i32 = arith.constant 0 : i32
    %c0_i32_0 = arith.constant 0 : i32
    %c0_i32_1 = arith.constant 0 : i32
    return %c0_i32, %c0_i32_0 : i32, i32
  }
  func.func @transform_3(%arg0: i32) -> i32 {
    %c0_i32 = arith.constant 0 : i32
    %c0_i32_0 = arith.constant 0 : i32
    return %c0_i32 : i32
  }
  func.func @transform_4(%arg0: i32) -> (i32, i32) {
    %c0_i32 = arith.constant 0 : i32
    %c0_i32_0 = arith.constant 0 : i32
    return %arg0, %c0_i32 : i32, i32
  }
}

</mosaic_0001>

<llo_original>
// kernel: tpu_custom_call.1
$region0: #{tpu_custom_call.1}
  #allocation0 [shape = 'u32[]', space=smem, size = 0x4, offset = 0x4, fixed_abs, tag = 'smem constant byte address 0x4 - core index']
  #allocation1 [shape = 'u32[144,128]{1,0:T(1,128)}', space=vmem, size = 0x12000, scoped, tag = 'internal scratch']
  %s0 = inlined_call_operand.hbm [shape: f32[8,768], index: 0, kind: input, shape index: {}]
  %s1 = inlined_call_operand.hbm [shape: f32[2,768], index: 1, kind: input, shape index: {}]
  %s2 = inlined_call_operand.hbm [shape: f32[768,128], index: 2, kind: input, shape index: {}]
  %s3 = inlined_call_operand.vmem [shape: f32[4], index: 3, kind: input, shape index: {}]
  %s4 = inlined_call_operand.hbm [shape: f32[8,128], index: 4, kind: output, shape index: {}]
  %s5 = sld [smem:[#allocation0]]
  $region42: #{tpu_custom_call.1} parent=0
    _
  %s7 = ssub.s32 1, %s5
  %s8 = scalar_select 0, %s7, %s5
  $region1: #{tpu_custom_call.1} parent=0
    #allocation2 [shape = 'u8[24576]{0}', space=vmem, size = 0x6000, scoped, tag = 'input window, operand 0, single buffered']
    #allocation3 [shape = 's32[1]{0}', space=sflag, size = 0x4, scoped, tag = 'scoped memory for tpu_custom_call.1']
    #allocation4 [shape = 's32[1]{0}', space=sflag, size = 0x4, scoped, tag = 'scoped memory for tpu_custom_call.1']
    #allocation5 [shape = 's32[1]{0}', space=sflag, size = 0x4, scoped, tag = 'scoped memory for tpu_custom_call.1']
    #allocation6 [shape = 'u8[6144]{0}', space=vmem, size = 0x1800, scoped, tag = 'input window, operand 1, single buffered']
    #allocation7 [shape = 's32[1]{0}', space=sflag, size = 0x4, scoped, tag = 'scoped memory for tpu_custom_call.1']
    #allocation8 [shape = 'u8[393216]{0}', space=vmem, size = 0x60000, scoped, tag = 'input window, operand 2, single buffered']
    #allocation9 [shape = 'u8[512]{0}', space=smem, size = 0x200, scoped, tag = 'input window, operand 3, single buffered']
    #allocation10 [shape = 'u8[4096]{0}', space=vmem, size = 0x1000, scoped, tag = 'output window, operand 0, single buffered']
    %9 = vsyncpa [#allocation3], 0
    %10 = vsyncpa [#allocation7], 0
    %11 = vsyncpa [#allocation5], 0
    %12 = vsyncpa [#allocation4], 0
    // Predicated region
    $region2: #{tpu_custom_call.1} parent=1 // pred_check
      _
    $region3: #{tpu_custom_call.1} parent=1 // pred_check_branch
      %14 = sbr.rel (0) target = $region5
    $region4: #{tpu_custom_call.1} parent=1 // pred_region
      %s16 = ssub.s32 768, 768
      %17 = vsyncadd [#allocation3], %s16
      %s19 = sshll.u32 [#allocation2], 4
      %s20 = int_to_ptr.vmem [resolvable:$true] %s19
      %22 = dma.hbm_to_vmem [thread:$0]  %s0, 768, %s20, [#allocation3]
    $region5: #{tpu_custom_call.1} parent=1 // pred_fallthru
      _
    // Predicated region
    $region6: #{tpu_custom_call.1} parent=1 // pred_check
      _
    $region7: #{tpu_custom_call.1} parent=1 // pred_check_branch
      %24 = sbr.rel (0) target = $region9
    $region8: #{tpu_custom_call.1} parent=1 // pred_region
      %s26 = ssub.s32 192, 192
      %27 = vsyncadd [#allocation7], %s26
      %s29 = sshll.u32 [#allocation6], 4
      %s30 = int_to_ptr.vmem [resolvable:$true] %s29
      %32 = dma.hbm_to_vmem [thread:$0]  %s1, 192, %s30, [#allocation7]
    $region9: #{tpu_custom_call.1} parent=1 // pred_fallthru
      _
    // Predicated region
    $region10: #{tpu_custom_call.1} parent=1 // pred_check
      _
    $region11: #{tpu_custom_call.1} parent=1 // pred_check_branch
      %34 = sbr.rel (0) target = $region13
    $region12: #{tpu_custom_call.1} parent=1 // pred_region
      %s36 = ssub.s32 12288, 12288
      %37 = vsyncadd [#allocation7], %s36
      %s38 = sshll.u32 [#allocation8], 4
      %s39 = int_to_ptr.vmem [resolvable:$true] %s38
      %44 = dma.hbm_to_vmem [thread:$0]  %s2, 12288, %s39, [#allocation7], 128, 128, 8
    $region13: #{tpu_custom_call.1} parent=1 // pred_fallthru
      _
    // Predicated region
    $region14: #{tpu_custom_call.1} parent=1 // pred_check
      _
    $region15: #{tpu_custom_call.1} parent=1 // pred_check_branch
      %46 = sbr.rel (0) target = $region17
    $region16: #{tpu_custom_call.1} parent=1 // pred_region
      %s48 = ssub.s32 16, 16
      %49 = vsyncadd [#allocation5], %s48
      %s51 = sshll.u32 %s3, 4
      %s52 = int_to_ptr.vmem [resolvable:$true] %s51
      %54 = dma.vmem_to_smem %s52, 16, [#allocation9], [#allocation5]
    $region17: #{tpu_custom_call.1} parent=1 // pred_fallthru
      _
    // Predicated region
    $region18: #{tpu_custom_call.1} parent=1 // pred_check
      _
    $region19: #{tpu_custom_call.1} parent=1 // pred_check_branch
      %56 = sbr.rel (0) target = $region21
    $region20: #{tpu_custom_call.1} parent=1 // pred_region
      %57 = dma.done [#allocation3], 768
    $region21: #{tpu_custom_call.1} parent=1 // pred_fallthru
      _
    // Predicated region
    $region22: #{tpu_custom_call.1} parent=1 // pred_check
      _
    $region23: #{tpu_custom_call.1} parent=1 // pred_check_branch
      %59 = sbr.rel (0) target = $region25
    $region24: #{tpu_custom_call.1} parent=1 // pred_region
      %60 = dma.done [#allocation7], 192
    $region25: #{tpu_custom_call.1} parent=1 // pred_fallthru
      _
    // Predicated region
    $region26: #{tpu_custom_call.1} parent=1 // pred_check
      _
    $region27: #{tpu_custom_call.1} parent=1 // pred_check_branch
      %62 = sbr.rel (0) target = $region29
    $region28: #{tpu_custom_call.1} parent=1 // pred_region
      %63 = dma.done [#allocation7], 12288
    $region29: #{tpu_custom_call.1} parent=1 // pred_fallthru
      _
    // Predicated region
    $region30: #{tpu_custom_call.1} parent=1 // pred_check
      _
    $region31: #{tpu_custom_call.1} parent=1 // pred_check_branch
      %65 = sbr.rel (0) target = $region33
    $region32: #{tpu_custom_call.1} parent=1 // pred_region
      %66 = dma.done [#allocation5], 16
    $region33: #{tpu_custom_call.1} parent=1 // pred_fallthru
      _
    %67 = sfence
    %v68 = vld [vmem:[#allocation2] sm:$0xff]
    %v69 = vld [vmem:[#allocation2 + $0x8] sm:$0xff]
    %v70 = vld [vmem:[#allocation2 + $0x10] sm:$0xff]
    %v71 = vld [vmem:[#allocation2 + $0x18] sm:$0xff]
    %v72 = vld [vmem:[#allocation2 + $0x20] sm:$0xff]
    %v73 = vld [vmem:[#allocation2 + $0x28] sm:$0xff]
    %v74 = vld [vmem:[#allocation6] ss:$2 sm:$0x3f]
    %s75 = scalar_lea.vmem [#allocation6], 1
    %v76 = vld [vmem:[%s75] ss:$2 sm:$0x3f]
    %v78 = vlaneseq
    %v79 = vshrl.u32 %v78, 7
    %v80 = vsub.s32 0, %v79
    %v81 = vrot.slane %v76, %v80
    %v82 = vlaneseq
    %v83 = vshrl.u32 %v82, 7
    %v84 = vsub.s32 1, %v83
    %v85 = vrot.slane %v76, %v84
    %v86 = vlaneseq
    %v87 = vshrl.u32 %v86, 7
    %v88 = vsub.s32 2, %v87
    %v89 = vrot.slane %v76, %v88
    %v90 = vlaneseq
    %v91 = vshrl.u32 %v90, 7
    %v92 = vsub.s32 3, %v91
    %v93 = vrot.slane %v76, %v92
    %v94 = vlaneseq
    %v95 = vshrl.u32 %v94, 7
    %v96 = vsub.s32 4, %v95
    %v97 = vrot.slane %v76, %v96
    %v98 = vlaneseq
    %v99 = vshrl.u32 %v98, 7
    %v100 = vsub.s32 5, %v99
    %v101 = vrot.slane %v76, %v100
    %v108 = vmul.f32 %v68, %v81
    %v109 = vmul.f32 %v69, %v85
    %v110 = vmul.f32 %v70, %v89
    %v111 = vmul.f32 %v71, %v93
    %v112 = vmul.f32 %v72, %v97
    %v113 = vmul.f32 %v73, %v101
    %v115 = vlaneseq
    %v116 = vshrl.u32 %v115, 7
    %v117 = vsub.s32 0, %v116
    %v118 = vrot.slane %v74, %v117
    %v119 = vlaneseq
    %v120 = vshrl.u32 %v119, 7
    %v121 = vsub.s32 1, %v120
    %v122 = vrot.slane %v74, %v121
    %v123 = vlaneseq
    %v124 = vshrl.u32 %v123, 7
    %v125 = vsub.s32 2, %v124
    %v126 = vrot.slane %v74, %v125
    %v127 = vlaneseq
    %v128 = vshrl.u32 %v127, 7
    %v129 = vsub.s32 3, %v128
    %v130 = vrot.slane %v74, %v129
    %v131 = vlaneseq
    %v132 = vshrl.u32 %v131, 7
    %v133 = vsub.s32 4, %v132
    %v134 = vrot.slane %v74, %v133
    %v135 = vlaneseq
    %v136 = vshrl.u32 %v135, 7
    %v137 = vsub.s32 5, %v136
    %v138 = vrot.slane %v74, %v137
    %v145 = vadd.f32 %v118, %v108
    %v146 = vadd.f32 %v122, %v109
    %v147 = vadd.f32 %v126, %v110
    %v148 = vadd.f32 %v130, %v111
    %v149 = vadd.f32 %v134, %v112
    %v150 = vadd.f32 %v138, %v113
    %v151 = vmul.f32 %v68, %v145
    %v152 = vmul.f32 %v69, %v146
    %v153 = vmul.f32 %v70, %v147
    %v154 = vmul.f32 %v71, %v148
    %v155 = vmul.f32 %v72, %v149
    %v156 = vmul.f32 %v73, %v150
    %v157 = vld [vmem:[#allocation8] sm:$0xff]
    %v158 = vld [vmem:[#allocation8 + $0x8] sm:$0xff]
    %v159 = vld [vmem:[#allocation8 + $0x10] sm:$0xff]
    %v160 = vld [vmem:[#allocation8 + $0x18] sm:$0xff]
    %v161 = vld [vmem:[#allocation8 + $0x20] sm:$0xff]
    %v162 = vld [vmem:[#allocation8 + $0x28] sm:$0xff]
    %v163 = vld [vmem:[#allocation8 + $0x30] sm:$0xff]
    %v164 = vld [vmem:[#allocation8 + $0x38] sm:$0xff]
    %v165 = vld [vmem:[#allocation8 + $0x40] sm:$0xff]
    %v166 = vld [vmem:[#allocation8 + $0x48] sm:$0xff]
    %v167 = vld [vmem:[#allocation8 + $0x50] sm:$0xff]
    %v168 = vld [vmem:[#allocation8 + $0x58] sm:$0xff]
    %v169 = vld [vmem:[#allocation8 + $0x60] sm:$0xff]
    %v170 = vld [vmem:[#allocation8 + $0x68] sm:$0xff]
    %v171 = vld [vmem:[#allocation8 + $0x70] sm:$0xff]
    %v172 = vld [vmem:[#allocation8 + $0x78] sm:$0xff]
    %v173 = vld [vmem:[#allocation8 + $0x80] sm:$0xff]
    %v174 = vld [vmem:[#allocation8 + $0x88] sm:$0xff]
    %v175 = vld [vmem:[#allocation8 + $0x90] sm:$0xff]
    %v176 = vld [vmem:[#allocation8 + $0x98] sm:$0xff]
    %v177 = vld [vmem:[#allocation8 + $0xa0] sm:$0xff]
    %v178 = vld [vmem:[#allocation8 + $0xa8] sm:$0xff]
    %v179 = vld [vmem:[#allocation8 + $0xb0] sm:$0xff]
    %v180 = vld [vmem:[#allocation8 + $0xb8] sm:$0xff]
    %v181 = vld [vmem:[#allocation8 + $0xc0] sm:$0xff]
    %v182 = vld [vmem:[#allocation8 + $0xc8] sm:$0xff]
    %v183 = vld [vmem:[#allocation8 + $0xd0] sm:$0xff]
    %v184 = vld [vmem:[#allocation8 + $0xd8] sm:$0xff]
    %v185 = vld [vmem:[#allocation8 + $0xe0] sm:$0xff]
    %v186 = vld [vmem:[#allocation8 + $0xe8] sm:$0xff]
    %v187 = vld [vmem:[#allocation8 + $0xf0] sm:$0xff]
    %v188 = vld [vmem:[#allocation8 + $0xf8] sm:$0xff]
    %v189 = vld [vmem:[#allocation8 + $0x100] sm:$0xff]
    %v190 = vld [vmem:[#allocation8 + $0x108] sm:$0xff]
    %v191 = vld [vmem:[#allocation8 + $0x110] sm:$0xff]
    %v192 = vld [vmem:[#allocation8 + $0x118] sm:$0xff]
    %v193 = vld [vmem:[#allocation8 + $0x120] sm:$0xff]
    %v194 = vld [vmem:[#allocation8 + $0x128] sm:$0xff]
    %v195 = vld [vmem:[#allocation8 + $0x130] sm:$0xff]
    %v196 = vld [vmem:[#allocation8 + $0x138] sm:$0xff]
    %v197 = vld [vmem:[#allocation8 + $0x140] sm:$0xff]
    %v198 = vld [vmem:[#allocation8 + $0x148] sm:$0xff]
    %v199 = vld [vmem:[#allocation8 + $0x150] sm:$0xff]
    %v200 = vld [vmem:[#allocation8 + $0x158] sm:$0xff]
    %v201 = vld [vmem:[#allocation8 + $0x160] sm:$0xff]
    %v202 = vld [vmem:[#allocation8 + $0x168] sm:$0xff]
    %v203 = vld [vmem:[#allocation8 + $0x170] sm:$0xff]
    %v204 = vld [vmem:[#allocation8 + $0x178] sm:$0xff]
    %v205 = vld [vmem:[#allocation8 + $0x180] sm:$0xff]
    %v206 = vld [vmem:[#allocation8 + $0x188] sm:$0xff]
    %v207 = vld [vmem:[#allocation8 + $0x190] sm:$0xff]
    %v208 = vld [vmem:[#allocation8 + $0x198] sm:$0xff]
    %v209 = vld [vmem:[#allocation8 + $0x1a0] sm:$0xff]
    %v210 = vld [vmem:[#allocation8 + $0x1a8] sm:$0xff]
    %v211 = vld [vmem:[#allocation8 + $0x1b0] sm:$0xff]
    %v212 = vld [vmem:[#allocation8 + $0x1b8] sm:$0xff]
    %v213 = vld [vmem:[#allocation8 + $0x1c0] sm:$0xff]
    %v214 = vld [vmem:[#allocation8 + $0x1c8] sm:$0xff]
    %v215 = vld [vmem:[#allocation8 + $0x1d0] sm:$0xff]
    %v216 = vld [vmem:[#allocation8 + $0x1d8] sm:$0xff]
    %v217 = vld [vmem:[#allocation8 + $0x1e0] sm:$0xff]
    %v218 = vld [vmem:[#allocation8 + $0x1e8] sm:$0xff]
    %v219 = vld [vmem:[#allocation8 + $0x1f0] sm:$0xff]
    %v220 = vld [vmem:[#allocation8 + $0x1f8] sm:$0xff]
    %v221 = vld [vmem:[#allocation8 + $0x200] sm:$0xff]
    %v222 = vld [vmem:[#allocation8 + $0x208] sm:$0xff]
    %v223 = vld [vmem:[#allocation8 + $0x210] sm:$0xff]
    %v224 = vld [vmem:[#allocation8 + $0x218] sm:$0xff]
    %v225 = vld [vmem:[#allocation8 + $0x220] sm:$0xff]
    %v226 = vld [vmem:[#allocation8 + $0x228] sm:$0xff]
    %v227 = vld [vmem:[#allocation8 + $0x230] sm:$0xff]
    %v228 = vld [vmem:[#allocation8 + $0x238] sm:$0xff]
    %v229 = vld [vmem:[#allocation8 + $0x240] sm:$0xff]
    %v230 = vld [vmem:[#allocation8 + $0x248] sm:$0xff]
    %v231 = vld [vmem:[#allocation8 + $0x250] sm:$0xff]
    %v232 = vld [vmem:[#allocation8 + $0x258] sm:$0xff]
    %v233 = vld [vmem:[#allocation8 + $0x260] sm:$0xff]
    %v234 = vld [vmem:[#allocation8 + $0x268] sm:$0xff]
    %v235 = vld [vmem:[#allocation8 + $0x270] sm:$0xff]
    %v236 = vld [vmem:[#allocation8 + $0x278] sm:$0xff]
    %v237 = vld [vmem:[#allocation8 + $0x280] sm:$0xff]
    %v238 = vld [vmem:[#allocation8 + $0x288] sm:$0xff]
    %v239 = vld [vmem:[#allocation8 + $0x290] sm:$0xff]
    %v240 = vld [vmem:[#allocation8 + $0x298] sm:$0xff]
    %v241 = vld [vmem:[#allocation8 + $0x2a0] sm:$0xff]
    %v242 = vld [vmem:[#allocation8 + $0x2a8] sm:$0xff]
    %v243 = vld [vmem:[#allocation8 + $0x2b0] sm:$0xff]
    %v244 = vld [vmem:[#allocation8 + $0x2b8] sm:$0xff]
    %v245 = vld [vmem:[#allocation8 + $0x2c0] sm:$0xff]
    %v246 = vld [vmem:[#allocation8 + $0x2c8] sm:$0xff]
    %v247 = vld [vmem:[#allocation8 + $0x2d0] sm:$0xff]
    %v248 = vld [vmem:[#allocation8 + $0x2d8] sm:$0xff]
    %v249 = vld [vmem:[#allocation8 + $0x2e0] sm:$0xff]
    %v250 = vld [vmem:[#allocation8 + $0x2e8] sm:$0xff]
    %v251 = vld [vmem:[#allocation8 + $0x2f0] sm:$0xff]
    %v252 = vld [vmem:[#allocation8 + $0x2f8] sm:$0xff]
    %v253 = vlaneseq
    %v254 = vshrl.u32 %v253, 7
    %v255 = vlaneseq
    %v256 = vand.u32 %v255, 127
    %s257 = smul.u32 0, 8
    %v258 = vstv %s257
    %v259 = vadd.s32 %v258, %v254
    %v260 = vmul.u32 %v259, 128
    %v261 = vadd.s32 %v260, %v256
    %v262 = vcvt.s32.f32 %v261
    %v263 = vadd.f32 %v262, 0.5
    %v264 = vmul.f32 %v263, 0.25
    %v265 = vfloor.f32 %v264
    %v266 = vadd.f32 %v265, 1.0
    %v267 = vmul.f32 %v266, 0.01
    %s268 = sld [smem:[#allocation9]]
    %s269 = sld [smem:[#allocation9 + $0x1]]
    %s270 = sld [smem:[#allocation9 + $0x2]]
    %s271 = sld [smem:[#allocation9 + $0x3]]
    %v272 = vmul.f32 %v267, %v267
    %v273 = vstv %s268
    %v274 = vmul.f32 %v267, %v273
    %v275 = vstv %s269
    %v276 = vmul.f32 %v272, %v275
    %v277 = vadd.f32 %v274, %v276
    %v278 = vmul.f32 %v272, %v267
    %v279 = vstv %s270
    %v280 = vmul.f32 %v278, %v279
    %v281 = vadd.f32 %v277, %v280
    %v282 = vstv %s271
    %v283 = vadd.f32 %v281, %v282
    %284 = vmatprep.subr.mxu0 0.0
    %285 = vmatpush1.msra.mxu0 %v157
    %286 = vmatprep.subr.mxu0 0.0
    %287 = vmatpush1.msra.mxu0 %v158
    %288 = vmatprep.subr.mxu0 0.0
    %289 = vmatpush1.msra.mxu0 %v159
    %290 = vmatprep.subr.mxu0 0.0
    %291 = vmatpush1.msra.mxu0 %v160
    %292 = vmatprep.subr.mxu0 0.0
    %293 = vmatpush1.msra.mxu0 %v161
    %294 = vmatprep.subr.mxu0 0.0
    %295 = vmatpush1.msra.mxu0 %v162
    %296 = vmatprep.subr.mxu0 0.0
    %297 = vmatpush1.msra.mxu0 %v163
    %298 = vmatprep.subr.mxu0 0.0
    %299 = vmatpush1.msra.mxu0 %v164
    %300 = vmatprep.subr.mxu0 0.0
    %301 = vmatpush1.msra.mxu0 %v165
    %302 = vmatprep.subr.mxu0 0.0
    %303 = vmatpush1.msra.mxu0 %v166
    %304 = vmatprep.subr.mxu0 0.0
    %305 = vmatpush1.msra.mxu0 %v167
    %306 = vmatprep.subr.mxu0 0.0
    %307 = vmatpush1.msra.mxu0 %v168
    %308 = vmatprep.subr.mxu0 0.0
    %309 = vmatpush1.msra.mxu0 %v169
    %310 = vmatprep.subr.mxu0 0.0
    %311 = vmatpush1.msra.mxu0 %v170
    %312 = vmatprep.subr.mxu0 0.0
    %313 = vmatpush1.msra.mxu0 %v171
    %314 = vmatprep.subr.mxu0 0.0
    %315 = vmatpush1.msra.mxu0 %v172
    %316 = vmatprep.subr.mxu0 0.0
    %317 = vmatpush1.msra.mxu0 %v173
    %318 = vmatprep.subr.mxu0 0.0
    %319 = vmatpush1.msra.mxu0 %v174
    %320 = vmatprep.subr.mxu0 0.0
    %321 = vmatpush1.msra.mxu0 %v175
    %322 = vmatprep.subr.mxu0 0.0
    %323 = vmatpush1.msra.mxu0 %v176
    %324 = vmatprep.subr.mxu0 0.0
    %325 = vmatpush1.msra.mxu0 %v177
    %326 = vmatprep.subr.mxu0 0.0
    %327 = vmatpush1.msra.mxu0 %v178
    %328 = vmatprep.subr.mxu0 0.0
    %329 = vmatpush1.msra.mxu0 %v179
    %330 = vmatprep.subr.mxu0 0.0
    %331 = vmatpush1.msra.mxu0 %v180
    %332 = vmatprep.subr.mxu0 0.0
    %333 = vmatpush1.msra.mxu0 %v181
    %334 = vmatprep.subr.mxu0 0.0
    %335 = vmatpush1.msra.mxu0 %v182
    %336 = vmatprep.subr.mxu0 0.0
    %337 = vmatpush1.msra.mxu0 %v183
    %338 = vmatprep.subr.mxu0 0.0
    %339 = vmatpush1.msra.mxu0 %v184
    %340 = vmatprep.subr.mxu0 0.0
    %341 = vmatpush1.msra.mxu0 %v185
    %342 = vmatprep.subr.mxu0 0.0
    %343 = vmatpush1.msra.mxu0 %v186
    %344 = vmatprep.subr.mxu0 0.0
    %345 = vmatpush1.msra.mxu0 %v187
    %346 = vmatprep.subr.mxu0 0.0
    %347 = vmatpush1.msra.mxu0 %v188
    %348 = vmatprep.mubr.f32.mxu0 %v152
    %349 = vmatmul.mubr.f32.gmra.mrb[0].mxu0 %v151
    %v350 = vpop.f32.mrb[0].mxu0
    %v351 = vadd.f32 %v283, %v350
    %v352 = vpop.f32.mrb[0].mxu0
    %353 = vdwg.mxu0
    %354 = vmatprep.subr.mxu0 0.0
    %355 = vmatpush1.msra.mxu0 %v189
    %356 = vmatprep.subr.mxu0 0.0
    %357 = vmatpush1.msra.mxu0 %v190
    %358 = vmatprep.subr.mxu0 0.0
    %359 = vmatpush1.msra.mxu0 %v191
    %360 = vmatprep.subr.mxu0 0.0
    %361 = vmatpush1.msra.mxu0 %v192
    %362 = vmatprep.subr.mxu0 0.0
    %363 = vmatpush1.msra.mxu0 %v193
    %364 = vmatprep.subr.mxu0 0.0
    %365 = vmatpush1.msra.mxu0 %v194
    %366 = vmatprep.subr.mxu0 0.0
    %367 = vmatpush1.msra.mxu0 %v195
    %368 = vmatprep.subr.mxu0 0.0
    %369 = vmatpush1.msra.mxu0 %v196
    %370 = vmatprep.subr.mxu0 0.0
    %371 = vmatpush1.msra.mxu0 %v197
    %372 = vmatprep.subr.mxu0 0.0
    %373 = vmatpush1.msra.mxu0 %v198
    %374 = vmatprep.subr.mxu0 0.0
    %375 = vmatpush1.msra.mxu0 %v199
    %376 = vmatprep.subr.mxu0 0.0
    %377 = vmatpush1.msra.mxu0 %v200
    %378 = vmatprep.subr.mxu0 0.0
    %379 = vmatpush1.msra.mxu0 %v201
    %380 = vmatprep.subr.mxu0 0.0
    %381 = vmatpush1.msra.mxu0 %v202
    %382 = vmatprep.subr.mxu0 0.0
    %383 = vmatpush1.msra.mxu0 %v203
    %384 = vmatprep.subr.mxu0 0.0
    %385 = vmatpush1.msra.mxu0 %v204
    %386 = vmatprep.subr.mxu0 0.0
    %387 = vmatpush1.msra.mxu0 %v205
    %388 = vmatprep.subr.mxu0 0.0
    %389 = vmatpush1.msra.mxu0 %v206
    %390 = vmatprep.subr.mxu0 0.0
    %391 = vmatpush1.msra.mxu0 %v207
    %392 = vmatprep.subr.mxu0 0.0
    %393 = vmatpush1.msra.mxu0 %v208
    %394 = vmatprep.subr.mxu0 0.0
    %395 = vmatpush1.msra.mxu0 %v209
    %396 = vmatprep.subr.mxu0 0.0
    %397 = vmatpush1.msra.mxu0 %v210
    %398 = vmatprep.subr.mxu0 0.0
    %399 = vmatpush1.msra.mxu0 %v211
    %400 = vmatprep.subr.mxu0 0.0
    %401 = vmatpush1.msra.mxu0 %v212
    %402 = vmatprep.subr.mxu0 0.0
    %403 = vmatpush1.msra.mxu0 %v213
    %404 = vmatprep.subr.mxu0 0.0
    %405 = vmatpush1.msra.mxu0 %v214
    %406 = vmatprep.subr.mxu0 0.0
    %407 = vmatpush1.msra.mxu0 %v215
    %408 = vmatprep.subr.mxu0 0.0
    %409 = vmatpush1.msra.mxu0 %v216
    %410 = vmatprep.subr.mxu0 0.0
    %411 = vmatpush1.msra.mxu0 %v217
    %412 = vmatprep.subr.mxu0 0.0
    %413 = vmatpush1.msra.mxu0 %v218
    %414 = vmatprep.subr.mxu0 0.0
    %415 = vmatpush1.msra.mxu0 %v219
    %416 = vmatprep.subr.mxu0 0.0
    %417 = vmatpush1.msra.mxu0 %v220
    %418 = vmatprep.mubr.f32.mxu0 %v154
    %419 = vmatmul.mubr.f32.gmra.mrb[0].mxu0 %v153
    %v420 = vpop.f32.mrb[0].mxu0
    %v421 = vadd.f32 %v351, %v420
    %v422 = vpop.f32.mrb[0].mxu0
    %423 = vdwg.mxu0
    %424 = vmatprep.subr.mxu0 0.0
    %425 = vmatpush1.msra.mxu0 %v221
    %426 = vmatprep.subr.mxu0 0.0
    %427 = vmatpush1.msra.mxu0 %v222
    %428 = vmatprep.subr.mxu0 0.0
    %429 = vmatpush1.msra.mxu0 %v223
    %430 = vmatprep.subr.mxu0 0.0
    %431 = vmatpush1.msra.mxu0 %v224
    %432 = vmatprep.subr.mxu0 0.0
    %433 = vmatpush1.msra.mxu0 %v225
    %434 = vmatprep.subr.mxu0 0.0
    %435 = vmatpush1.msra.mxu0 %v226
    %436 = vmatprep.subr.mxu0 0.0
    %437 = vmatpush1.msra.mxu0 %v227
    %438 = vmatprep.subr.mxu0 0.0
    %439 = vmatpush1.msra.mxu0 %v228
    %440 = vmatprep.subr.mxu0 0.0
    %441 = vmatpush1.msra.mxu0 %v229
    %442 = vmatprep.subr.mxu0 0.0
    %443 = vmatpush1.msra.mxu0 %v230
    %444 = vmatprep.subr.mxu0 0.0
    %445 = vmatpush1.msra.mxu0 %v231
    %446 = vmatprep.subr.mxu0 0.0
    %447 = vmatpush1.msra.mxu0 %v232
    %448 = vmatprep.subr.mxu0 0.0
    %449 = vmatpush1.msra.mxu0 %v233
    %450 = vmatprep.subr.mxu0 0.0
    %451 = vmatpush1.msra.mxu0 %v234
    %452 = vmatprep.subr.mxu0 0.0
    %453 = vmatpush1.msra.mxu0 %v235
    %454 = vmatprep.subr.mxu0 0.0
    %455 = vmatpush1.msra.mxu0 %v236
    %456 = vmatprep.subr.mxu0 0.0
    %457 = vmatpush1.msra.mxu0 %v237
    %458 = vmatprep.subr.mxu0 0.0
    %459 = vmatpush1.msra.mxu0 %v238
    %460 = vmatprep.subr.mxu0 0.0
    %461 = vmatpush1.msra.mxu0 %v239
    %462 = vmatprep.subr.mxu0 0.0
    %463 = vmatpush1.msra.mxu0 %v240
    %464 = vmatprep.subr.mxu0 0.0
    %465 = vmatpush1.msra.mxu0 %v241
    %466 = vmatprep.subr.mxu0 0.0
    %467 = vmatpush1.msra.mxu0 %v242
    %468 = vmatprep.subr.mxu0 0.0
    %469 = vmatpush1.msra.mxu0 %v243
    %470 = vmatprep.subr.mxu0 0.0
    %471 = vmatpush1.msra.mxu0 %v244
    %472 = vmatprep.subr.mxu0 0.0
    %473 = vmatpush1.msra.mxu0 %v245
    %474 = vmatprep.subr.mxu0 0.0
    %475 = vmatpush1.msra.mxu0 %v246
    %476 = vmatprep.subr.mxu0 0.0
    %477 = vmatpush1.msra.mxu0 %v247
    %478 = vmatprep.subr.mxu0 0.0
    %479 = vmatpush1.msra.mxu0 %v248
    %480 = vmatprep.subr.mxu0 0.0
    %481 = vmatpush1.msra.mxu0 %v249
    %482 = vmatprep.subr.mxu0 0.0
    %483 = vmatpush1.msra.mxu0 %v250
    %484 = vmatprep.subr.mxu0 0.0
    %485 = vmatpush1.msra.mxu0 %v251
    %486 = vmatprep.subr.mxu0 0.0
    %487 = vmatpush1.msra.mxu0 %v252
    %488 = vmatprep.mubr.f32.mxu0 %v156
    %489 = vmatmul.mubr.f32.gmra.mrb[0].mxu0 %v155
    %v490 = vpop.f32.mrb[0].mxu0
    %v491 = vadd.f32 %v421, %v490
    %v492 = vpop.f32.mrb[0].mxu0
    %493 = vdwg.mxu0
    %494 = vst [vmem:[#allocation10] sm:$0xff] %v491
    // Predicated region
    $region34: #{tpu_custom_call.1} parent=1 // pred_check
      _
    $region35: #{tpu_custom_call.1} parent=1 // pred_check_branch
      %496 = sbr.rel (0) target = $region37
    $region36: #{tpu_custom_call.1} parent=1 // pred_region
      %s498 = ssub.s32 128, 128
      %499 = vsyncadd [#allocation4], %s498
      %s501 = sshll.u32 [#allocation10], 4
      %s502 = int_to_ptr.vmem [resolvable:$true] %s501
      %504 = dma.vmem_to_hbm [thread:$0]  %s502, 128, %s4, [#allocation4]
    $region37: #{tpu_custom_call.1} parent=1 // pred_fallthru
      _
    // Predicated region
    $region38: #{tpu_custom_call.1} parent=1 // pred_check
      _
    $region39: #{tpu_custom_call.1} parent=1 // pred_check_branch
      %506 = sbr.rel (0) target = $region41
    $region40: #{tpu_custom_call.1} parent=1 // pred_region
      %507 = dma.done [#allocation4], 128
    $region41: #{tpu_custom_call.1} parent=1 // pred_fallthru
      _
    %508 = vsyncpa [#allocation3], 1
    %509 = vsyncpa [#allocation7], 1
    %510 = vsyncpa [#allocation4], 1
    %511 = vsyncpa [#allocation5], 1

</llo_original>
